<compile_context>
chip_gen: v7x
topology: tpu7x:2x2x1
jax: 0.10.0
libtpu: 0.0.40
codegen_flags: <defaults>
</compile_context>

<pallas_src>
import jax
import jax.numpy as jnp
from jax import lax
from jax.experimental import pallas as pl
from jax.experimental.pallas import tpu as pltpu


def _dot_bias_kernel(cols_ref, w_ref, b_ref, o_ref):
    """One (image, spatial-tile) step: out[co, p] = sum_k w[co, k] * cols[k, p] + b[co].

    cols_ref: (1, KPAD, TILE)   bf16  im2col block (streamed)
    w_ref   : (COUT, KPAD)      bf16  fused base+DCF weights (resident)
    b_ref   : (COUT, 1)         f32   base-layer bias (resident)
    o_ref   : (1, COUT, TILE)   f32   NCHW-flat output tile (lane-dense)
    """
    acc = jnp.dot(w_ref[...], cols_ref[0], preferred_element_type=jnp.float32)
    o_ref[0] = (acc + b_ref[...]).astype(o_ref.dtype)


def _pick_tile_cols(ppad, kpad, cout, n_images, *, lane_cap=2048,
                    vmem_budget=24 << 20):
    """Largest 128-multiple divisor of ppad within the VMEM budget / lane cap."""
    candidates = [c for c in range(128, ppad + 1, 128) if ppad % c == 0]

    def fits(c):
        in_bytes = 2 * kpad * c * 2      # double-buffered bf16 cols block
        out_bytes = 2 * cout * c * 4     # double-buffered f32 output block
        return c <= lane_cap and (in_bytes + out_bytes) <= vmem_budget

    good = [c for c in candidates if fits(c)] or [128]
    tile = max(good)
    # Keep >= 2 total grid steps (v7x has 2 TensorCores); with N >= 2 images the
    # batch axis already provides that.
    if n_images == 1 and tile == ppad:
        smaller = [c for c in good if c < ppad]
        if smaller:
            tile = max(smaller)
    return tile


def conv2d_as_matmul(cols, w2d, bias, *, tile_cols):
    """cols:(N,KPAD,PPAD) bf16, w2d:(COUT,KPAD) bf16, bias:(COUT,) f32 -> (N,COUT,PPAD) f32."""
    N, KPAD, PPAD = cols.shape
    COUT, K2 = w2d.shape
    assert K2 == KPAD and PPAD % tile_cols == 0 and tile_cols % 128 == 0
    tiles = PPAD // tile_cols
    bias2d = bias.reshape(COUT, 1).astype(jnp.float32)

    return pl.pallas_call(
        _dot_bias_kernel,
        grid=(N, tiles),
        in_specs=[
            # Streamed im2col block: changes with both grid axes.
            pl.BlockSpec((1, KPAD, tile_cols), lambda n, t: (n, 0, t)),
            # Weights / bias: constant index_map -> stay resident in VMEM.
            pl.BlockSpec((COUT, KPAD), lambda n, t: (0, 0)),
            pl.BlockSpec((COUT, 1), lambda n, t: (0, 0)),
        ],
        out_specs=pl.BlockSpec((1, COUT, tile_cols), lambda n, t: (n, 0, t)),
        out_shape=jax.ShapeDtypeStruct((N, COUT, PPAD), jnp.float32),
        compiler_params=pltpu.CompilerParams(
            dimension_semantics=("parallel", "parallel"),
            vmem_limit_bytes=32 * 1024 * 1024),
    )(cols, w2d, bias2d)


def _im2col_nchw(x_bf16, *, KH, KW, pad, kpad, ppad):
    """(N, CIN, H, W) -> (N, kpad, ppad) bf16 patches, K ordered (ci, kh, kw)."""
    N, CIN, H, W = x_bf16.shape
    HO = H + 2 * pad - KH + 1
    WO = W + 2 * pad - KW + 1
    xp = jnp.pad(x_bf16, ((0, 0), (0, 0), (pad, pad), (pad, pad)))
    taps = []
    for kh in range(KH):
        for kw in range(KW):
            sl = lax.slice(xp, (0, 0, kh, kw), (N, CIN, kh + HO, kw + WO))
            taps.append(sl.reshape(N, CIN, 1, HO * WO))
    cols = jnp.concatenate(taps, axis=2)             # (N, CIN, KH*KW, HO*WO)
    cols = cols.reshape(N, CIN * KH * KW, HO * WO)   # K ordered (ci, kh, kw)
    K, P = CIN * KH * KW, HO * WO
    cols = jnp.pad(cols, ((0, 0), (0, kpad - K), (0, ppad - P)))
    return cols, HO, WO


def dcf_conv2d_forward(x_nchw, params, *, KH, KW, pad):
    """DCFConv2d.forward (nlayers='bases_l1', sr0=sr1=1, stride=1, dilation=1, groups=1)."""
    w_base = params["base_weight"]          # (O, I, KH, KW)  f32
    b_base = params["base_bias"]            # (O,)            f32
    coeff = params["coeff"]                 # (O, I, m)       f32
    bases = params["bases"]                 # (m, KH, KW)     f32

    # Weight synthesis is tiny (O*I x m @ m x KH*KW): plain JAX, fused into the
    # base weights via conv linearity (only the base conv carries a bias).
    w_dcf = jnp.einsum('cvm,mki->cvki', coeff, bases)
    w_total = w_base + w_dcf                # f32 fusion; single bf16 cast below
    COUT, CIN, _, _ = w_total.shape

    N, CIN_x, H, W = x_nchw.shape
    assert CIN_x == CIN
    HO = H + 2 * pad - KH + 1
    WO = W + 2 * pad - KW + 1

    K = CIN * KH * KW
    KPAD = -(-K // 16) * 16                 # bf16 sublane-pack aligned (36 -> 48)
    P = HO * WO
    PPAD = -(-P // 128) * 128               # lane-dense, unmasked output stores

    # Weights flattened in the same (ci, kh, kw) order as the im2col K axis,
    # zero-padded to KPAD (padded columns contribute exactly zero).
    w2d = w_total.reshape(COUT, K).astype(jnp.bfloat16)
    w2d = jnp.pad(w2d, ((0, 0), (0, KPAD - K)))

    cols, _, _ = _im2col_nchw(x_nchw.astype(jnp.bfloat16),
                              KH=KH, KW=KW, pad=pad, kpad=KPAD, ppad=PPAD)

    tile_cols = _pick_tile_cols(PPAD, KPAD, COUT, N)
    out_flat = conv2d_as_matmul(cols, w2d, b_base, tile_cols=tile_cols)

    # Already NCHW-flat: drop spatial padding, pure reshape (no transpose).
    return out_flat[:, :, :P].reshape(N, COUT, HO, WO)


if __name__ == "__main__":
    key = jax.random.PRNGKey(0)
    N, CIN, H, W = 2, 4, 16, 16
    COUT, KH, KW, M = 8, 3, 3, 9
    pad = 1

    k1, k2, k3, k4, k5 = jax.random.split(key, 5)
    x = jax.random.normal(k1, (N, CIN, H, W), jnp.float32)
    # base nn.Conv2d(4, 8, 3, stride=1, padding=1, bias=True) parameters
    base_weight = jax.random.normal(k2, (COUT, CIN, KH, KW), jnp.float32) / jnp.sqrt(
        float(CIN * KH * KW))
    base_bias = jax.random.normal(k3, (COUT,), jnp.float32) * 0.1
    # TODO(synk): the real module initializes `coeff` via solve_lasso/dict_learning
    # on the base weights (an offline sparse-coding solver run at __init__); it has
    # no Pallas equivalent, so we use a deterministic random init of the same
    # shape. `bases` (zeros in the module) gets small random values so the DCF
    # branch is numerically non-trivial.
    coeff = jax.random.normal(k4, (COUT, CIN, M), jnp.float32) * 0.1
    bases = jax.random.normal(k5, (M, KH, KW), jnp.float32) * 0.1

    params = dict(base_weight=base_weight, base_bias=base_bias,
                  coeff=coeff, bases=bases)

    out = dcf_conv2d_forward(x, params, KH=KH, KW=KW, pad=pad)
    out = jax.block_until_ready(out)

    # Pure-JAX f32 reference of the original forward (two convs, then sum).
    w_dcf_ref = jnp.einsum('cvm,mki->cvki', coeff, bases)
    dn = ('NCHW', 'OIHW', 'NCHW')
    base_out = jax.lax.conv_general_dilated(
        x, base_weight, (1, 1), ((pad, pad), (pad, pad)),
        dimension_numbers=dn) + base_bias[None, :, None, None]
    dcf_out = jax.lax.conv_general_dilated(
        x, w_dcf_ref, (1, 1), ((pad, pad), (pad, pad)), dimension_numbers=dn)
    ref = base_out + dcf_out

    assert out.shape == ref.shape == (N, COUT, H, W)
    # bf16 matmul operands (f32 accumulation) -> tolerance scaled to |ref|.
    err = float(jnp.max(jnp.abs(out - ref)))
    scale = float(jnp.max(jnp.abs(ref)))
    assert err < 2e-2 * scale + 1e-3, (err, scale)
    print("KERNEL_OK")
</pallas_src>

<mosaic_0001>
module attributes {stable_mosaic.version = 11 : i64} {
  func.func @_dot_bias_kernel(%arg0: i32, %arg1: i32, %arg2: memref<1x48x256xbf16, #tpu.memory_space<vmem>>, %arg3: memref<8x48xbf16, #tpu.memory_space<vmem>>, %arg4: memref<8x1xf32, #tpu.memory_space<vmem>>, %arg5: memref<1x8x256xf32, #tpu.memory_space<vmem>>) attributes {dimension_semantics = [#tpu.dimension_semantics<parallel>, #tpu.dimension_semantics<parallel>], iteration_bounds = array<i64: 2, 1>, scalar_prefetch = 0 : i64, scratch_operands = 0 : i64, tpu.core_type = #tpu.core_type<tc>, window_params = [{transform_indices = @transform_0, window_bounds = array<i64: 1, 48, 256>}, {pipeline_mode = #tpu.pipeline_mode<synchronous>, transform_indices = @transform_1, window_bounds = array<i64: 8, 48>}, {pipeline_mode = #tpu.pipeline_mode<synchronous>, transform_indices = @transform_2, window_bounds = array<i64: 8, 1>}, {transform_indices = @transform_3, window_bounds = array<i64: 1, 8, 256>}]} {
    %c0 = arith.constant 0 : index
    %c0_0 = arith.constant 0 : index
    %0 = vector.load %arg3[%c0, %c0_0] : memref<8x48xbf16, #tpu.memory_space<vmem>>, vector<8x48xbf16>
    %c0_1 = arith.constant 0 : index
    %c0_2 = arith.constant 0 : index
    %c0_3 = arith.constant 0 : index
    %1 = vector.load %arg2[%c0_1, %c0_2, %c0_3] : memref<1x48x256xbf16, #tpu.memory_space<vmem>>, vector<1x48x256xbf16>
    %2 = vector.shape_cast %1 : vector<1x48x256xbf16> to vector<48x256xbf16>
    %cst = arith.constant dense<0.000000e+00> : vector<8x256xf32>
    %3 = tpu.matmul %0, %2, %cst {dimension_numbers = #tpu.dot_dimension_numbers<[1], [0], [0], [1], [0, 0, 1, 1], [], []>} : vector<8x48xbf16>, vector<48x256xbf16>, vector<8x256xf32> -> vector<8x256xf32>
    %c0_4 = arith.constant 0 : index
    %c0_5 = arith.constant 0 : index
    %4 = vector.load %arg4[%c0_4, %c0_5] : memref<8x1xf32, #tpu.memory_space<vmem>>, vector<8x1xf32>
    %5 = vector.broadcast %4 : vector<8x1xf32> to vector<8x256xf32>
    %6 = arith.addf %3, %5 : vector<8x256xf32>
    %c0_6 = arith.constant 0 : index
    %c0_7 = arith.constant 0 : index
    %c0_8 = arith.constant 0 : index
    %7 = vector.load %arg5[%c0_6, %c0_7, %c0_8] : memref<1x8x256xf32, #tpu.memory_space<vmem>>, vector<1x8x256xf32>
    %8 = vector.shape_cast %7 : vector<1x8x256xf32> to vector<8x256xf32>
    %9 = vector.shape_cast %6 : vector<8x256xf32> to vector<1x8x256xf32>
    tpu.vector_store %arg5[%c0_6, %c0_7, %c0_8], %9 {strides = array<i32>} : memref<1x8x256xf32, #tpu.memory_space<vmem>>, vector<1x8x256xf32>,
    return
  }
  func.func @transform_0(%arg0: i32, %arg1: i32) -> (i32, i32, i32) {
    %c0_i32 = arith.constant 0 : i32
    %c0_i32_0 = arith.constant 0 : i32
    return %arg0, %c0_i32, %arg1 : i32, i32, i32
  }
  func.func @transform_1(%arg0: i32, %arg1: i32) -> (i32, i32) {
    %c0_i32 = arith.constant 0 : i32
    %c0_i32_0 = arith.constant 0 : i32
    %c0_i32_1 = arith.constant 0 : i32
    return %c0_i32, %c0_i32_0 : i32, i32
  }
  func.func @transform_2(%arg0: i32, %arg1: i32) -> (i32, i32) {
    %c0_i32 = arith.constant 0 : i32
    %c0_i32_0 = arith.constant 0 : i32
    %c0_i32_1 = arith.constant 0 : i32
    return %c0_i32, %c0_i32_0 : i32, i32
  }
  func.func @transform_3(%arg0: i32, %arg1: i32) -> (i32, i32, i32) {
    %c0_i32 = arith.constant 0 : i32
    %c0_i32_0 = arith.constant 0 : i32
    return %arg0, %c0_i32, %arg1 : i32, i32, i32
  }
}

</mosaic_0001>

<llo_original>
// kernel: tpu_custom_call.1
$region0: #{tpu_custom_call.1}
  #allocation0 [shape = 'u32[]', space=smem, size = 0x4, offset = 0x4, fixed_abs, tag = 'smem constant byte address 0x4 - core index']
  #allocation1 [shape = 'u32[144,128]{1,0:T(1,128)}', space=vmem, size = 0x12000, scoped, tag = 'internal scratch']
  %s0 = inlined_call_operand.hbm [shape: bf16[2,48,256], index: 0, kind: input, shape index: {}]
  %s1 = inlined_call_operand.vmem [shape: bf16[8,48], index: 1, kind: input, shape index: {}]
  %s2 = inlined_call_operand.vmem [shape: f32[8,1], index: 2, kind: input, shape index: {}]
  %s3 = inlined_call_operand.hbm [shape: f32[2,8,256], index: 3, kind: output, shape index: {}]
  %s4 = sld [smem:[#allocation0]]
  $region49: #{tpu_custom_call.1} parent=0
    _
  %s6 = ssub.s32 1, %s4
  %s7 = scalar_select 0, %s6, %s4
  $region1: #{tpu_custom_call.1} parent=0
    #allocation2 [shape = 'u8[49152]{0}', space=vmem, size = 0xc000, scoped, tag = 'input window, operand 0']
    #allocation3 [shape = 's32[2]{0}', space=sflag, size = 0x8, scoped, tag = 'scoped memory for tpu_custom_call.1']
    #allocation4 [shape = 's32[2]{0}', space=sflag, size = 0x8, scoped, tag = 'scoped memory for tpu_custom_call.1']
    #allocation5 [shape = 'u8[16384]{0}', space=vmem, size = 0x4000, scoped, tag = 'output window, operand 0']
    %8 = vsyncpa [#allocation3], 0
    %s9 = scalar_lea.sflag [#allocation3], 1
    %10 = vsyncpa %s9, 0
    %11 = vsyncpa [#allocation4], 0
    %s12 = scalar_lea.sflag [#allocation4], 1
    %13 = vsyncpa %s12, 0
    loop: start=0, step=1, limit=4
    $region2: #{tpu_custom_call.1} parent=1 // loop_pre_header
      _
    $region3: #{tpu_custom_call.1} parent=1 // loop_header
      %s15 = sphi 0, %s19
      %p16 = scmp.ge.s32.totalorder %s15, 4
      %s22 = sphi 0, %s34
      %s23 = sphi 0, %s30
      %s24 = sphi 0, %s22
      %s25 = sphi 0, %s23
      %s26 = sphi 0, %s24
      %s27 = sphi 0, %s25
      %s39 = sphi 0, %s41
      %s42 = sphi 0, %s39
      %s43 = sphi 0, %s42
      %s59 = sphi 0, %s43
      %s63 = sphi 0, %s63
      %s65 = sphi 0, %s63
      %s66 = sphi 0, %s65
      %s80 = sphi 0, %s66
      %s84 = sphi 0, %s84
      %s86 = sphi 0, %s84
      %s87 = sphi 0, %s86
      %s101 = sphi 0, %s87
      %s109 = sphi 0, %s111
      %s112 = sphi 0, %s109
      %s113 = sphi 0, %s112
      %s129 = sphi 0, %s113
    $region4: #{tpu_custom_call.1} parent=1 // loop_header_branch
      %18 = sbr.rel (%p16) target = $region8
    $region5: #{tpu_custom_call.1} parent=1 // loop_body
      %s20 = ssub.s32 %s15, 1
      %s21 = ssub.s32 %s15, 2
      %s28 = sadd.s32 1, %s23
      %p29 = scmp.ge.s32.totalorder %s28, 1
      %s30 = scalar_select %p29, 0, %s28
      %s31 = sadd.s32 1, %s22
      %s32 = scalar_select %p29, %s31, %s22
      %p33 = scmp.ge.s32.totalorder %s32, 2
      %s34 = scalar_select %p33, 0, %s32
      %s35 = ssub.s32 %s22, %s34
      %s36 = ssub.s32 %s23, %s30
      %s37 = sor.u32 %s35, %s36
      %p38 = scmp.eq.s32.totalorder %s37, 0
      %s40 = sadd.s32 %s39, 1
      %s41 = scalar_select %p38, %s39, %s40
      %p44 = pneg %p38
      %p45 = scmp.eq.s32.totalorder %s15, 1
      %p46 = por %p44, %p45
      %p47 = scmp.ne.s32.totalorder %s39, %s42
      %p48 = scmp.eq.s32.totalorder %s15, 0
      %p49 = por %p47, %p48
      %p50 = scmp.ne.s32.totalorder %s39, %s42
      %p51 = scmp.eq.s32.totalorder %s20, 1
      %p52 = por %p50, %p51
      %p53 = scmp.ne.s32.totalorder %s42, %s43
      %p54 = scmp.eq.s32.totalorder %s20, 0
      %p55 = por %p53, %p54
      %p56 = scmp.ne.s32.totalorder %s42, %s43
      %p57 = scmp.eq.s32.totalorder %s21, 1
      %p58 = por %p56, %p57
      %p60 = scmp.ne.s32.totalorder %s43, %s59
      %p61 = scmp.eq.s32.totalorder %s21, 0
      %p62 = por %p60, %p61
      %s64 = sadd.s32 %s63, 1
      %p67 = scmp.eq.s32.totalorder %s15, 1
      %p68 = scmp.ne.s32.totalorder %s63, %s65
      %p69 = scmp.eq.s32.totalorder %s15, 0
      %p70 = por %p68, %p69
      %p71 = scmp.ne.s32.totalorder %s63, %s65
      %p72 = scmp.eq.s32.totalorder %s20, 1
      %p73 = por %p71, %p72
      %p74 = scmp.ne.s32.totalorder %s65, %s66
      %p75 = scmp.eq.s32.totalorder %s20, 0
      %p76 = por %p74, %p75
      %p77 = scmp.ne.s32.totalorder %s65, %s66
      %p78 = scmp.eq.s32.totalorder %s21, 1
      %p79 = por %p77, %p78
      %p81 = scmp.ne.s32.totalorder %s66, %s80
      %p82 = scmp.eq.s32.totalorder %s21, 0
      %p83 = por %p81, %p82
      %s85 = sadd.s32 %s84, 1
      %p88 = scmp.eq.s32.totalorder %s15, 1
      %p89 = scmp.ne.s32.totalorder %s84, %s86
      %p90 = scmp.eq.s32.totalorder %s15, 0
      %p91 = por %p89, %p90
      %p92 = scmp.ne.s32.totalorder %s84, %s86
      %p93 = scmp.eq.s32.totalorder %s20, 1
      %p94 = por %p92, %p93
      %p95 = scmp.ne.s32.totalorder %s86, %s87
      %p96 = scmp.eq.s32.totalorder %s20, 0
      %p97 = por %p95, %p96
      %p98 = scmp.ne.s32.totalorder %s86, %s87
      %p99 = scmp.eq.s32.totalorder %s21, 1
      %p100 = por %p98, %p99
      %p102 = scmp.ne.s32.totalorder %s87, %s101
      %p103 = scmp.eq.s32.totalorder %s21, 0
      %p104 = por %p102, %p103
      %s105 = ssub.s32 %s22, %s34
      %s106 = ssub.s32 %s23, %s30
      %s107 = sor.u32 %s105, %s106
      %p108 = scmp.eq.s32.totalorder %s107, 0
      %s110 = sadd.s32 %s109, 1
      %s111 = scalar_select %p108, %s109, %s110
      %p114 = pneg %p108
      %p115 = scmp.eq.s32.totalorder %s15, 1
      %p116 = por %p114, %p115
      %p117 = scmp.ne.s32.totalorder %s109, %s112
      %p118 = scmp.eq.s32.totalorder %s15, 0
      %p119 = por %p117, %p118
      %p120 = scmp.ne.s32.totalorder %s109, %s112
      %p121 = scmp.eq.s32.totalorder %s20, 1
      %p122 = por %p120, %p121
      %p123 = scmp.ne.s32.totalorder %s112, %s113
      %p124 = scmp.eq.s32.totalorder %s20, 0
      %p125 = por %p123, %p124
      %p126 = scmp.ne.s32.totalorder %s112, %s113
      %p127 = scmp.eq.s32.totalorder %s21, 1
      %p128 = por %p126, %p127
      %p130 = scmp.ne.s32.totalorder %s113, %s129
      %p131 = scmp.eq.s32.totalorder %s21, 0
      %p132 = por %p130, %p131
      %p133 = scmp.le.s32.totalorder 1, %s15
      %p134 = scmp.lt.s32.totalorder %s15, 3
      %p135 = pnand %p133, %p134
      %p136 = pneg %p135
      // Predicated region
      $region9: #{tpu_custom_call.1} parent=5 // pred_check
        _
      $region10: #{tpu_custom_call.1} parent=5 // pred_check_branch
        %138 = sbr.rel (%p135) target = $region12
      $region11: #{tpu_custom_call.1} parent=5 // pred_region
        %s139 = ssub.s32 %s15, 1
        // Predicated region
        $region13: #{tpu_custom_call.1} parent=11 // pred_check
          %p140 = pneg %p76
        $region14: #{tpu_custom_call.1} parent=11 // pred_check_branch
          %142 = sbr.rel (%p140) target = $region16
        $region15: #{tpu_custom_call.1} parent=11 // pred_region
          _
        $region16: #{tpu_custom_call.1} parent=11 // pred_fallthru
          _
        // Predicated region
        $region17: #{tpu_custom_call.1} parent=11 // pred_check
          %p143 = pneg %p97
        $region18: #{tpu_custom_call.1} parent=11 // pred_check_branch
          %145 = sbr.rel (%p143) target = $region20
        $region19: #{tpu_custom_call.1} parent=11 // pred_region
          _
        $region20: #{tpu_custom_call.1} parent=11 // pred_fallthru
          _
      $region12: #{tpu_custom_call.1} parent=5 // pred_fallthru
        _
      %p146 = scmp.lt.s32.totalorder %s15, 2
      // Predicated region
      $region21: #{tpu_custom_call.1} parent=5 // pred_check
        %p147 = pneg %p146
      $region22: #{tpu_custom_call.1} parent=5 // pred_check_branch
        %149 = sbr.rel (%p147) target = $region24
      $region23: #{tpu_custom_call.1} parent=5 // pred_region
        // Predicated region
        $region25: #{tpu_custom_call.1} parent=23 // pred_check
          %p150 = pneg %p49
        $region26: #{tpu_custom_call.1} parent=23 // pred_check_branch
          %152 = sbr.rel (%p150) target = $region28
        $region27: #{tpu_custom_call.1} parent=23 // pred_region
          %s153 = sand.u32 %s39, 1
          %s154 = scalar_lea.sflag [#allocation3], %s153
          %s155 = sand.u32 %s39, 1
          %s156 = smul.addr %s155, 48
          %s157 = scalar_lea.vmem [#allocation2], %s156
          %s158 = smul.u32 2, %s23
          %s160 = ssub.s32 768, 768
          %161 = vsyncadd %s154, %s160
          %s162 = smul.addr %s22, 12
          %s163 = sadd.s32 %s158, %s162
          %s164 = smul.addr %s163, 64
          %s165 = scalar_lea.hbm %s0, %s164
          %s166 = sshll.u32 %s157, 4
          %s167 = int_to_ptr.vmem [resolvable:$true] %s166
          %172 = dma.hbm_to_vmem [thread:$0]  %s165, 768, %s167, %s154, 128, 128, 8
        $region28: #{tpu_custom_call.1} parent=23 // pred_fallthru
          _
      $region24: #{tpu_custom_call.1} parent=5 // pred_fallthru
        _
      %p173 = scmp.le.s32.totalorder 1, %s15
      %p174 = scmp.lt.s32.totalorder %s15, 3
      %p175 = pnand %p173, %p174
      %p176 = pneg %p175
      // Predicated region
      $region29: #{tpu_custom_call.1} parent=5 // pred_check
        _
      $region30: #{tpu_custom_call.1} parent=5 // pred_check_branch
        %178 = sbr.rel (%p175) target = $region32
      $region31: #{tpu_custom_call.1} parent=5 // pred_region
        %s179 = ssub.s32 %s15, 1
        %s180 = sand.u32 %s42, 1
        %s181 = scalar_lea.sflag [#allocation3], %s180
        %s182 = sand.u32 %s42, 1
        %s183 = smul.addr %s182, 48
        %s184 = scalar_lea.vmem [#allocation2], %s183
        // Predicated region
        $region33: #{tpu_custom_call.1} parent=31 // pred_check
          %p185 = pneg %p55
        $region34: #{tpu_custom_call.1} parent=31 // pred_check_branch
          %187 = sbr.rel (%p185) target = $region36
        $region35: #{tpu_custom_call.1} parent=31 // pred_region
          %188 = dma.done %s181, 768
        $region36: #{tpu_custom_call.1} parent=31 // pred_fallthru
          _
        %s189 = sand.u32 %s42, 1
        %s190 = scalar_lea.sflag [#allocation3], %s189
        %s191 = sand.u32 %s42, 1
        %s192 = smul.addr %s191, 48
        %s193 = scalar_lea.vmem [#allocation2], %s192
        %p194 = pneg %p55
        %p195 = pneg %p52
        %p196 = pneg %p76
        %p197 = pneg %p73
        %p198 = pneg %p97
        %p199 = pneg %p94
        %p200 = pneg %p125
        %p201 = pneg %p122
        %s202 = sand.u32 %s112, 1
        %s203 = scalar_lea.sflag [#allocation4], %s202
        %s204 = sand.u32 %s112, 1
        %s205 = smul.addr %s204, 16
        %s206 = scalar_lea.vmem [#allocation5], %s205
        %s207 = smul.u32 2, %s25
        %s208 = smul.u32 2, %s25
        %v210 = vld [vmem:[%s1] sm:$0xf]
        %v211 = vld [vmem:[%s184] sm:$0xff]
        %v212 = vld [vmem:[%s184 + $0x8] sm:$0xff]
        %v213 = vld [vmem:[%s184 + $0x10] sm:$0xff]
        %v214 = vld [vmem:[%s184 + $0x18] sm:$0xff]
        %v215 = vld [vmem:[%s184 + $0x20] sm:$0xff]
        %v216 = vld [vmem:[%s184 + $0x28] sm:$0xff]
        %v217 = vld [vmem:[%s2] sm:$0xff]
        %219 = vset.pattern.permute.xlu0 0
        %220 = vperm.xlu0 %219, %v217
        %v221 = vpop.permute.xlu0 %220
        %v229 = vunpack.c.l.b16 %v211
        %v230 = vunpack.c.h.b16 %v211
        %v231 = vunpack.c.l.b16 %v212
        %v232 = vunpack.c.h.b16 %v212
        %v233 = vunpack.c.l.b16 %v213
        %v234 = vunpack.c.h.b16 %v213
        %v235 = vunpack.c.l.b16 %v214
        %v236 = vunpack.c.h.b16 %v214
        %v237 = vunpack.c.l.b16 %v215
        %v238 = vunpack.c.h.b16 %v215
        %v239 = vunpack.c.l.b16 %v216
        %v240 = vunpack.c.h.b16 %v216
        %v241 = vpack.c.b16 %v231, %v229
        %v242 = vpack.c.b16 %v232, %v230
        %v243 = vpack.c.b16 %v235, %v233
        %v244 = vpack.c.b16 %v236, %v234
        %v245 = vpack.c.b16 %v239, %v237
        %v246 = vpack.c.b16 %v240, %v238
        %vm253 = vcmask 392192
        %v255 = vsel %vm253, %v210, 0
        %257 = vmatprep.subr.bf16.mxu0 %v242
        %258 = vmatpush1.bf16.msra.mxu0 %v241
        %259 = vmatprep.subr.bf16.mxu0 %v244
        %260 = vmatpush1.bf16.msra.mxu0 %v243
        %261 = vmatprep.subr.bf16.mxu0 %v246
        %262 = vmatpush1.bf16.msra.mxu0 %v245
        %263 = vmatprep.subr.bf16.mxu0 0
        %264 = vmatpush1.bf16.msra.mxu0 0
        %265 = vmatprep.subr.bf16.mxu0 0
        %266 = vmatpush1.bf16.msra.mxu0 0
        %267 = vmatprep.subr.bf16.mxu0 0
        %268 = vmatpush1.bf16.msra.mxu0 0
        %269 = vmatprep.subr.bf16.mxu0 0
        %270 = vmatpush1.bf16.msra.mxu0 0
        %271 = vmatprep.subr.bf16.mxu0 0
        %272 = vmatpush1.bf16.msra.mxu0 0
        %273 = vmatprep.subr.bf16.mxu0 0
        %274 = vmatpush1.bf16.msra.mxu0 0
        %275 = vmatprep.subr.bf16.mxu0 0
        %276 = vmatpush1.bf16.msra.mxu0 0
        %277 = vmatprep.subr.bf16.mxu0 0
        %278 = vmatpush1.bf16.msra.mxu0 0
        %279 = vmatprep.subr.bf16.mxu0 0
        %280 = vmatpush1.bf16.msra.mxu0 0
        %281 = vmatprep.subr.bf16.mxu0 0
        %282 = vmatpush1.bf16.msra.mxu0 0
        %283 = vmatprep.subr.bf16.mxu0 0
        %284 = vmatpush1.bf16.msra.mxu0 0
        %285 = vmatprep.subr.bf16.mxu0 0
        %286 = vmatpush1.bf16.msra.mxu0 0
        %287 = vmatprep.subr.bf16.mxu0 0
        %288 = vmatpush1.bf16.msra.mxu0 0
        %289 = vmatprep.mubr.bf16.mxu0 0
        %290 = vmatmul.mubr.bf16.gmra.mrb[0].mxu0 %v255
        %v291 = vpop.f32.mrb[0].mxu0
        %v292 = vadd.f32 %v221, %v291
        %v293 = vpop.f32.mrb[0].mxu0
        %v294 = vadd.f32 %v221, %v293
        %v295 = vpop.f32.mrb[0].mxu0
        %v296 = vpop.f32.mrb[0].mxu0
        %297 = vdwg.mxu0
        %298 = vst [vmem:[%s206] sm:$0xff] %v292
        %299 = vst [vmem:[%s206 + $0x8] sm:$0xff] %v294
        %s300 = sand.u32 %s112, 1
        %s301 = scalar_lea.sflag [#allocation4], %s300
        %s302 = sand.u32 %s112, 1
        %s303 = smul.addr %s302, 16
        %s304 = scalar_lea.vmem [#allocation5], %s303
        // Predicated region
        $region37: #{tpu_custom_call.1} parent=31 // pred_check
          %p305 = pneg %p122
        $region38: #{tpu_custom_call.1} parent=31 // pred_check_branch
          %307 = sbr.rel (%p305) target = $region40
        $region39: #{tpu_custom_call.1} parent=31 // pred_region
          %s308 = smul.u32 2, %s25
          %s310 = ssub.s32 256, 256
          %311 = vsyncadd %s301, %s310
          %s312 = smul.addr %s24, 2
          %s313 = sadd.s32 %s308, %s312
          %s314 = smul.addr %s313, 128
          %s315 = scalar_lea.hbm %s3, %s314
          %s317 = sshll.u32 %s304, 4
          %s318 = int_to_ptr.vmem [resolvable:$true] %s317
          %320 = dma.vmem_to_hbm [thread:$0]  %s318, 256, %s315, %s301
        $region40: #{tpu_custom_call.1} parent=31 // pred_fallthru
          _
      $region32: #{tpu_custom_call.1} parent=5 // pred_fallthru
        _
      %p321 = scmp.le.s32.totalorder 2, %s15
      // Predicated region
      $region41: #{tpu_custom_call.1} parent=5 // pred_check
        %p322 = pneg %p321
      $region42: #{tpu_custom_call.1} parent=5 // pred_check_branch
        %324 = sbr.rel (%p322) target = $region44
      $region43: #{tpu_custom_call.1} parent=5 // pred_region
        %s325 = ssub.s32 %s15, 2
        // Predicated region
        $region45: #{tpu_custom_call.1} parent=43 // pred_check
          %p326 = pneg %p128
        $region46: #{tpu_custom_call.1} parent=43 // pred_check_branch
          %328 = sbr.rel (%p326) target = $region48
        $region47: #{tpu_custom_call.1} parent=43 // pred_region
          %s329 = sand.u32 %s113, 1
          %s330 = scalar_lea.sflag [#allocation4], %s329
          %s331 = sand.u32 %s113, 1
          %s332 = smul.addr %s331, 16
          %s333 = scalar_lea.vmem [#allocation5], %s332
          %334 = dma.done %s330, 256
        $region48: #{tpu_custom_call.1} parent=43 // pred_fallthru
          _
      $region44: #{tpu_custom_call.1} parent=5 // pred_fallthru
        _
    $region6: #{tpu_custom_call.1} parent=1 // loop_footer
      %s19 = sadd.s32 1, %s15
    $region7: #{tpu_custom_call.1} parent=1 // loop_footer_branch
      %14 = sbr.rel target = $region3
    $region8: #{tpu_custom_call.1} parent=1 // loop_exit
      _
    %335 = vsyncpa [#allocation3], 1
    %s336 = scalar_lea.sflag [#allocation3], 1
    %337 = vsyncpa %s336, 1
    %338 = vsyncpa [#allocation4], 1
    %s339 = scalar_lea.sflag [#allocation4], 1
    %340 = vsyncpa %s339, 1

</llo_original>
